<compile_context>
chip_gen: v7x
topology: tpu7x:2x2x1
jax: 0.10.0
libtpu: 0.0.40
codegen_flags: <defaults>
</compile_context>

<pallas_src>
import jax
import jax.numpy as jnp
from jax.experimental import pallas as pl
from jax.experimental.pallas import tpu as pltpu


def _round_up(x, m):
    return ((x + m - 1) // m) * m


def _proj_kernel(x_ref, w_ref, b_ref, o_ref):
    """One (tm, N_p) output tile; weight/bias fully resident in VMEM.

    x_ref: (tm, K)   f32  activation tile (cast to bf16 in-register)
    w_ref: (K,  N_p) bf16 full weight, pre-transposed to (in, out) layout
    b_ref: (1,  N_p) f32  full bias
    o_ref: (tm, N_p) f32  output tile
    """
    x = x_ref[...].astype(jnp.bfloat16)
    acc = jnp.dot(x, w_ref[...], preferred_element_type=jnp.float32)
    o_ref[...] = (acc + b_ref[...]).astype(o_ref.dtype)


def _pick_tm(M, K, N_p):
    """Big M tiles to amortize grid-step overhead, VMEM- and megacore-aware."""
    tm = 1024

    def vmem_bytes(t):
        # double-buffered x + out, resident weight (x2 bufs allocated) + bias
        return 2 * t * K * 4 + 2 * t * N_p * 4 + 2 * K * N_p * 2 + 2 * N_p * 4

    while tm > 64 and vmem_bytes(tm) > (20 << 20):
        tm //= 2

    if M <= tm:
        if M >= 512:
            # keep >= 2 M tiles so both v7x TensorCores get work
            tm = _round_up(pl.cdiv(M, 2), 16)
        else:
            tm = max(8, _round_up(M, 8))
    return tm


def pallas_linear_head(x2d, weight, bias):
    """y = x2d @ weight.T + bias (weight in nn.Linear (N, K) layout).

    x2d:    (M, K) f32
    weight: (N, K) f32
    bias:   (N,)   f32
    returns (M, N_p) f32 with N_p = round_up(N, 128); caller slices [:, :N].
    """
    M, K = x2d.shape
    N, K2 = weight.shape
    assert K == K2

    N_p = _round_up(N, 128)
    tm = _pick_tm(M, K, N_p)
    grid = (pl.cdiv(M, tm),)

    # One-time parameter prep: (K, N_p) bf16 weight, (1, N_p) f32 bias.
    w_kn = jnp.pad(weight.astype(jnp.bfloat16).T, ((0, 0), (0, N_p - N)))
    b_p = jnp.pad(bias.astype(jnp.float32), (0, N_p - N)).reshape(1, N_p)

    cost = pl.CostEstimate(
        flops=2 * M * N_p * K,
        transcendentals=0,
        bytes_accessed=M * K * 4 + K * N_p * 2 + N_p * 4 + M * N_p * 4,
    )

    out = pl.pallas_call(
        _proj_kernel,
        out_shape=jax.ShapeDtypeStruct((M, N_p), jnp.float32),
        grid=grid,
        in_specs=[
            pl.BlockSpec((tm, K), lambda i: (i, 0)),     # x tile (f32)
            pl.BlockSpec((K, N_p), lambda i: (0, 0)),    # resident weight
            pl.BlockSpec((1, N_p), lambda i: (0, 0)),    # resident bias
        ],
        out_specs=pl.BlockSpec((tm, N_p), lambda i: (i, 0)),
        compiler_params=pltpu.CompilerParams(
            dimension_semantics=("parallel",),
            vmem_limit_bytes=32 * 1024 * 1024,
        ),
        cost_estimate=cost,
    )(x2d, w_kn, b_p)

    return out


def output_projection_forward(x, weight, bias, image_size, patch_size,
                              output_dims):
    """Pallas/JAX equivalent of OutputProjection.forward.

    x:      (B, T, C)   tokens (f32)
    weight: (P*P*D, C)  nn.Linear layout (out_features, in_features)
    bias:   (P*P*D,)
    returns (B, D, H//8, W//8) NCHW, matching PyTorch.
    """
    B, T, C = x.shape
    P = patch_size
    D = output_dims
    N = P * P * D
    H_out = image_size[0] // 8
    W_out = image_size[1] // 8
    Gh, Gw = H_out // P, W_out // P
    assert Gh * Gw == T, "token count must match fold grid"

    # Hot path: tiled matmul + bias in Pallas. reshape (B,T,C)->(B*T,C) is free.
    y = pallas_linear_head(x.reshape(B * T, C), weight, bias)  # (B*T, N_p)

    # Fold (stride == kernel) is a pure re-arrangement.  nn.Fold interprets the
    # channel dim as (D, P, P) with blocks laid row-major over (Gh, Gw).  The
    # N_p -> N slice is folded into the same reshape/transpose copy pass.
    N_p = y.shape[-1]
    y = y.reshape(B, Gh, Gw, N_p)[..., :N]
    y = y.reshape(B, Gh, Gw, D, P, P)
    y = jnp.transpose(y, (0, 3, 1, 4, 2, 5))        # (B, D, Gh, P, Gw, P)
    return y.reshape(B, D, Gh * P, Gw * P)          # (B, D, H_out, W_out)


if __name__ == "__main__":
    # Small, consistent configuration:
    #   image_size = (128, 128) -> fold output 16x16
    #   patch_size = 4          -> 4x4 grid of patches -> T = 16 tokens
    #   embed_size = 32, output_dims = 3, batch = 2
    image_size = (128, 128)
    patch_size = 4
    embed_size = 32
    output_dims = 3
    B = 2
    H_out, W_out = image_size[0] // 8, image_size[1] // 8
    T = (H_out // patch_size) * (W_out // patch_size)
    N = patch_size * patch_size * output_dims

    key = jax.random.PRNGKey(0)
    kx, kw, kb = jax.random.split(key, 3)
    x = jax.random.normal(kx, (B, T, embed_size), dtype=jnp.float32)
    # nn.Linear parameter shapes: (out_features, in_features) and (out_features,)
    weight = jax.random.normal(kw, (N, embed_size), dtype=jnp.float32) * 0.02
    bias = jax.random.normal(kb, (N,), dtype=jnp.float32) * 0.01

    out = output_projection_forward(x, weight, bias, image_size, patch_size,
                                    output_dims)
    out = jax.block_until_ready(out)
    assert out.shape == (B, output_dims, H_out, W_out), out.shape

    # Pure-JAX reference with the same bf16 operand rounding, f32 accumulation.
    x_r = x.astype(jnp.bfloat16).astype(jnp.float32)
    w_r = weight.astype(jnp.bfloat16).astype(jnp.float32)
    y_ref = jnp.einsum("btc,nc->btn", x_r, w_r,
                       precision=jax.lax.Precision.HIGHEST) + bias
    y_ref = y_ref.reshape(B, H_out // patch_size, W_out // patch_size,
                          output_dims, patch_size, patch_size)
    y_ref = jnp.transpose(y_ref, (0, 3, 1, 4, 2, 5)).reshape(
        B, output_dims, H_out, W_out)
    max_err = float(jnp.max(jnp.abs(out - y_ref)))
    assert jnp.allclose(out, y_ref, atol=1e-4, rtol=1e-4), max_err

    print("KERNEL_OK")
</pallas_src>

<mosaic_0001>
module attributes {stable_mosaic.version = 11 : i64} {
  func.func @_proj_kernel(%arg0: i32, %arg1: memref<32x32xf32, #tpu.memory_space<vmem>>, %arg2: memref<32x128xbf16, #tpu.memory_space<vmem>>, %arg3: memref<1x128xf32, #tpu.memory_space<vmem>>, %arg4: memref<32x128xf32, #tpu.memory_space<vmem>>) attributes {dimension_semantics = [#tpu.dimension_semantics<parallel>], iteration_bounds = array<i64: 1>, scalar_prefetch = 0 : i64, scratch_operands = 0 : i64, tpu.core_type = #tpu.core_type<tc>, window_params = [{transform_indices = @transform_0, window_bounds = array<i64: 32, 32>}, {pipeline_mode = #tpu.pipeline_mode<synchronous>, transform_indices = @transform_1, window_bounds = array<i64: 32, 128>}, {pipeline_mode = #tpu.pipeline_mode<synchronous>, transform_indices = @transform_2, window_bounds = array<i64: 1, 128>}, {transform_indices = @transform_3, window_bounds = array<i64: 32, 128>}]} {
    %c0 = arith.constant 0 : index
    %c0_0 = arith.constant 0 : index
    %0 = vector.load %arg1[%c0, %c0_0] : memref<32x32xf32, #tpu.memory_space<vmem>>, vector<32x32xf32>
    %1 = arith.truncf %0 : vector<32x32xf32> to vector<32x32xbf16>
    %c0_1 = arith.constant 0 : index
    %c0_2 = arith.constant 0 : index
    %2 = vector.load %arg2[%c0_1, %c0_2] : memref<32x128xbf16, #tpu.memory_space<vmem>>, vector<32x128xbf16>
    %cst = arith.constant dense<0.000000e+00> : vector<32x128xf32>
    %3 = tpu.matmul %1, %2, %cst {dimension_numbers = #tpu.dot_dimension_numbers<[1], [0], [0], [1], [0, 0, 1, 1], [], []>} : vector<32x32xbf16>, vector<32x128xbf16>, vector<32x128xf32> -> vector<32x128xf32>
    %c0_3 = arith.constant 0 : index
    %c0_4 = arith.constant 0 : index
    %4 = vector.load %arg3[%c0_3, %c0_4] : memref<1x128xf32, #tpu.memory_space<vmem>>, vector<1x128xf32>
    %5 = vector.broadcast %4 : vector<1x128xf32> to vector<32x128xf32>
    %6 = arith.addf %3, %5 : vector<32x128xf32>
    %c0_5 = arith.constant 0 : index
    %c0_6 = arith.constant 0 : index
    %7 = vector.load %arg4[%c0_5, %c0_6] : memref<32x128xf32, #tpu.memory_space<vmem>>, vector<32x128xf32>
    tpu.vector_store %arg4[%c0_5, %c0_6], %6 {strides = array<i32>} : memref<32x128xf32, #tpu.memory_space<vmem>>, vector<32x128xf32>,
    return
  }
  func.func @transform_0(%arg0: i32) -> (i32, i32) {
    %c0_i32 = arith.constant 0 : i32
    %c0_i32_0 = arith.constant 0 : i32
    return %arg0, %c0_i32 : i32, i32
  }
  func.func @transform_1(%arg0: i32) -> (i32, i32) {
    %c0_i32 = arith.constant 0 : i32
    %c0_i32_0 = arith.constant 0 : i32
    %c0_i32_1 = arith.constant 0 : i32
    return %c0_i32, %c0_i32_0 : i32, i32
  }
  func.func @transform_2(%arg0: i32) -> (i32, i32) {
    %c0_i32 = arith.constant 0 : i32
    %c0_i32_0 = arith.constant 0 : i32
    %c0_i32_1 = arith.constant 0 : i32
    return %c0_i32, %c0_i32_0 : i32, i32
  }
  func.func @transform_3(%arg0: i32) -> (i32, i32) {
    %c0_i32 = arith.constant 0 : i32
    %c0_i32_0 = arith.constant 0 : i32
    return %arg0, %c0_i32 : i32, i32
  }
}

</mosaic_0001>

<llo_original>
// kernel: tpu_custom_call.1
$region0: #{tpu_custom_call.1}
  #allocation0 [shape = 'u32[]', space=smem, size = 0x4, offset = 0x4, fixed_abs, tag = 'smem constant byte address 0x4 - core index']
  #allocation1 [shape = 'u32[144,128]{1,0:T(1,128)}', space=vmem, size = 0x12000, scoped, tag = 'internal scratch']
  %s0 = inlined_call_operand.hbm [shape: f32[32,32], index: 0, kind: input, shape index: {}]
  %s1 = inlined_call_operand.hbm [shape: bf16[32,128], index: 1, kind: input, shape index: {}]
  %s2 = inlined_call_operand.vmem [shape: f32[1,128], index: 2, kind: input, shape index: {}]
  %s3 = inlined_call_operand.hbm [shape: f32[32,128], index: 3, kind: output, shape index: {}]
  %s4 = sld [smem:[#allocation0]]
  $region30: #{tpu_custom_call.1} parent=0
    _
  %s6 = ssub.s32 1, %s4
  %s7 = scalar_select 0, %s6, %s4
  $region1: #{tpu_custom_call.1} parent=0
    #allocation2 [shape = 'u8[16384]{0}', space=vmem, size = 0x4000, scoped, tag = 'input window, operand 0, single buffered']
    #allocation3 [shape = 's32[1]{0}', space=sflag, size = 0x4, scoped, tag = 'scoped memory for tpu_custom_call.1']
    #allocation4 [shape = 's32[1]{0}', space=sflag, size = 0x4, scoped, tag = 'scoped memory for tpu_custom_call.1']
    #allocation5 [shape = 'u8[8192]{0}', space=vmem, size = 0x2000, scoped, tag = 'input window, operand 1, single buffered']
    #allocation6 [shape = 's32[1]{0}', space=sflag, size = 0x4, scoped, tag = 'scoped memory for tpu_custom_call.1']
    #allocation7 [shape = 'u8[16384]{0}', space=vmem, size = 0x4000, scoped, tag = 'output window, operand 0, single buffered']
    %8 = vsyncpa [#allocation3], 0
    %9 = vsyncpa [#allocation6], 0
    %10 = vsyncpa [#allocation4], 0
    // Predicated region
    $region2: #{tpu_custom_call.1} parent=1 // pred_check
      _
    $region3: #{tpu_custom_call.1} parent=1 // pred_check_branch
      %12 = sbr.rel (0) target = $region5
    $region4: #{tpu_custom_call.1} parent=1 // pred_region
      %s14 = ssub.s32 512, 512
      %15 = vsyncadd [#allocation3], %s14
      %s16 = sshll.u32 [#allocation2], 4
      %s17 = int_to_ptr.vmem [resolvable:$true] %s16
      %22 = dma.hbm_to_vmem [thread:$0]  %s0, 512, %s17, [#allocation3], 128, 128, 8
    $region5: #{tpu_custom_call.1} parent=1 // pred_fallthru
      _
    // Predicated region
    $region6: #{tpu_custom_call.1} parent=1 // pred_check
      _
    $region7: #{tpu_custom_call.1} parent=1 // pred_check_branch
      %24 = sbr.rel (0) target = $region9
    $region8: #{tpu_custom_call.1} parent=1 // pred_region
      %s26 = ssub.s32 256, 256
      %27 = vsyncadd [#allocation6], %s26
      %s28 = sshll.u32 [#allocation5], 4
      %s29 = int_to_ptr.vmem [resolvable:$true] %s28
      %34 = dma.hbm_to_vmem [thread:$0]  %s1, 256, %s29, [#allocation6], 64, 64, 4
    $region9: #{tpu_custom_call.1} parent=1 // pred_fallthru
      _
    // Predicated region
    $region10: #{tpu_custom_call.1} parent=1 // pred_check
      _
    $region11: #{tpu_custom_call.1} parent=1 // pred_check_branch
      %36 = sbr.rel (0) target = $region13
    $region12: #{tpu_custom_call.1} parent=1 // pred_region
      _
    $region13: #{tpu_custom_call.1} parent=1 // pred_fallthru
      _
    // Predicated region
    $region14: #{tpu_custom_call.1} parent=1 // pred_check
      _
    $region15: #{tpu_custom_call.1} parent=1 // pred_check_branch
      %38 = sbr.rel (0) target = $region17
    $region16: #{tpu_custom_call.1} parent=1 // pred_region
      %39 = dma.done [#allocation3], 512
    $region17: #{tpu_custom_call.1} parent=1 // pred_fallthru
      _
    // Predicated region
    $region18: #{tpu_custom_call.1} parent=1 // pred_check
      _
    $region19: #{tpu_custom_call.1} parent=1 // pred_check_branch
      %41 = sbr.rel (0) target = $region21
    $region20: #{tpu_custom_call.1} parent=1 // pred_region
      %42 = dma.done [#allocation6], 256
    $region21: #{tpu_custom_call.1} parent=1 // pred_fallthru
      _
    %v44 = vld [vmem:[#allocation2] sm:$0xff]
    %v45 = vld [vmem:[#allocation2 + $0x8] sm:$0xff]
    %v46 = vld [vmem:[#allocation2 + $0x10] sm:$0xff]
    %v47 = vld [vmem:[#allocation2 + $0x18] sm:$0xff]
    %v48 = vpack.c.bf16 %v45, %v44
    %v49 = vpack.c.bf16 %v47, %v46
    %v50 = vld [vmem:[#allocation5] sm:$0xf]
    %v51 = vld [vmem:[#allocation5 + $0x4] sm:$0xf]
    %v52 = vld [vmem:[#allocation5 + $0x8] sm:$0xf]
    %v53 = vld [vmem:[#allocation5 + $0xc] sm:$0xf]
    %v54 = vld [vmem:[%s2] sm:$0x1]
    %v56 = vlaneseq
    %v57 = vshrl.u32 %v56, 7
    %v58 = vsub.s32 0, %v57
    %v59 = vrot.slane %v54, %v58
    %v65 = vunpack.c.l.b16 %v50
    %v66 = vunpack.c.l.b16 %v51
    %v67 = vunpack.c.l.b16 %v52
    %v68 = vunpack.c.l.b16 %v53
    %v69 = vpack.c.b16 %v66, %v65
    %v70 = vpack.c.b16 %v68, %v67
    %vm73 = vcmask 261120
    %v75 = vsel %vm73, %v48, 0
    %v78 = vsel %vm73, %v49, 0
    %80 = vmatprep.subr.bf16.mxu0 0
    %81 = vmatpush1.bf16.msra.mxu0 %v69
    %82 = vmatprep.subr.bf16.mxu0 0
    %83 = vmatpush1.bf16.msra.mxu0 %v70
    %84 = vmatprep.subr.bf16.mxu0 0
    %85 = vmatpush1.bf16.msra.mxu0 0
    %86 = vmatprep.subr.bf16.mxu0 0
    %87 = vmatpush1.bf16.msra.mxu0 0
    %88 = vmatprep.subr.bf16.mxu0 0
    %89 = vmatpush1.bf16.msra.mxu0 0
    %90 = vmatprep.subr.bf16.mxu0 0
    %91 = vmatpush1.bf16.msra.mxu0 0
    %92 = vmatprep.subr.bf16.mxu0 0
    %93 = vmatpush1.bf16.msra.mxu0 0
    %94 = vmatprep.subr.bf16.mxu0 0
    %95 = vmatpush1.bf16.msra.mxu0 0
    %96 = vmatprep.subr.bf16.mxu0 0
    %97 = vmatpush1.bf16.msra.mxu0 0
    %98 = vmatprep.subr.bf16.mxu0 0
    %99 = vmatpush1.bf16.msra.mxu0 0
    %100 = vmatprep.subr.bf16.mxu0 0
    %101 = vmatpush1.bf16.msra.mxu0 0
    %102 = vmatprep.subr.bf16.mxu0 0
    %103 = vmatpush1.bf16.msra.mxu0 0
    %104 = vmatprep.subr.bf16.mxu0 0
    %105 = vmatpush1.bf16.msra.mxu0 0
    %106 = vmatprep.subr.bf16.mxu0 0
    %107 = vmatpush1.bf16.msra.mxu0 0
    %108 = vmatprep.subr.bf16.mxu0 0
    %109 = vmatpush1.bf16.msra.mxu0 0
    %110 = vmatprep.subr.bf16.mxu0 0
    %111 = vmatpush1.bf16.msra.mxu0 0
    %112 = vmatprep.mubr.bf16.mxu0 0
    %113 = vmatmul.mubr.bf16.gmra.mrb[0].mxu0 %v75
    %v114 = vpop.f32.mrb[0].mxu0
    %v115 = vadd.f32 %v59, %v114
    %v116 = vpop.f32.mrb[0].mxu0
    %v117 = vpop.f32.mrb[0].mxu0
    %v118 = vadd.f32 %v59, %v117
    %v119 = vpop.f32.mrb[0].mxu0
    %120 = vmatprep.mubr.bf16.mxu0 0
    %121 = vmatmul.mubr.bf16.gmra.mrb[0].mxu0 %v78
    %v122 = vpop.f32.mrb[0].mxu0
    %v123 = vadd.f32 %v59, %v122
    %v124 = vpop.f32.mrb[0].mxu0
    %v125 = vpop.f32.mrb[0].mxu0
    %v126 = vadd.f32 %v59, %v125
    %v127 = vpop.f32.mrb[0].mxu0
    %128 = vdwg.mxu0
    %129 = vst [vmem:[#allocation7] sm:$0xff] %v115
    %130 = vst [vmem:[#allocation7 + $0x8] sm:$0xff] %v118
    %131 = vst [vmem:[#allocation7 + $0x10] sm:$0xff] %v123
    %132 = vst [vmem:[#allocation7 + $0x18] sm:$0xff] %v126
    // Predicated region
    $region22: #{tpu_custom_call.1} parent=1 // pred_check
      _
    $region23: #{tpu_custom_call.1} parent=1 // pred_check_branch
      %134 = sbr.rel (0) target = $region25
    $region24: #{tpu_custom_call.1} parent=1 // pred_region
      %s136 = ssub.s32 512, 512
      %137 = vsyncadd [#allocation4], %s136
      %s138 = sshll.u32 [#allocation7], 4
      %s139 = int_to_ptr.vmem [resolvable:$true] %s138
      %144 = dma.vmem_to_hbm [thread:$0]  %s139, 512, %s3, [#allocation4], 128, 128, 8
    $region25: #{tpu_custom_call.1} parent=1 // pred_fallthru
      _
    // Predicated region
    $region26: #{tpu_custom_call.1} parent=1 // pred_check
      _
    $region27: #{tpu_custom_call.1} parent=1 // pred_check_branch
      %146 = sbr.rel (0) target = $region29
    $region28: #{tpu_custom_call.1} parent=1 // pred_region
      %147 = dma.done [#allocation4], 512
    $region29: #{tpu_custom_call.1} parent=1 // pred_fallthru
      _
    %148 = vsyncpa [#allocation3], 1
    %149 = vsyncpa [#allocation6], 1
    %150 = vsyncpa [#allocation4], 1

</llo_original>
